<compile_context>
chip_gen: v5e
topology: v5e:2x2
jax: 0.10.0
libtpu: 0.0.40
codegen_flags: <defaults>
</compile_context>

<pallas_src>
from functools import partial

import jax
import jax.numpy as jnp
from jax.experimental import pallas as pl
from jax.experimental.pallas import tpu as pltpu

LANE = 128      # fused hidden width (64 value lanes | 64 policy lanes)
HIDDEN = 64


def _round_up(n, m):
    return ((n + m - 1) // m) * m


def _cdiv(a, b):
    return -(-a // b)


def _choose_tile_b(batch, max_tile):
    """Balanced batch tiling.

    Big tiles amortize the ~0.35 us per-grid-step overhead, balanced tiling
    caps the padding waste at <8 rows per tile, and large batches are split
    into >=2 grid steps so v7x's two TensorCores both get work (harmless on
    v5e/v6e, which have a single TC).
    """
    b8 = _round_up(max(batch, 1), 8)
    n_tiles = _cdiv(b8, max_tile)
    if b8 >= 2048:
        n_tiles = max(n_tiles, 2)
    return _round_up(_cdiv(b8, n_tiles), 8)


def _fused_mlp_kernel(x_ref, w1_ref, w23_ref, b_ref, o_ref):
    """x:(TB,OBS_PAD)  w1:(OBS_PAD,128)  w23:(2,128,128)  b:(8,128)  o:(TB,128).

    Matmul operands are in the compute dtype (bf16 by default -> native MXU
    path); accumulation, bias add and tanh stay in f32.
    """
    cd = w23_ref.dtype
    b = b_ref[...]
    h = jnp.dot(x_ref[...], w1_ref[...],
                preferred_element_type=jnp.float32) + b[0:1]
    h = jnp.tanh(h)
    h = jnp.dot(h.astype(cd), w23_ref[0],
                preferred_element_type=jnp.float32) + b[1:2]
    h = jnp.tanh(h)
    o = jnp.dot(h.astype(cd), w23_ref[1],
                preferred_element_type=jnp.float32) + b[2:3]
    o_ref[...] = o.astype(o_ref.dtype)


def _pack_params(params, obs_size, action_size, compute_dtype):
    """Pack the 12 Linear params into W1 (OBS_PAD,128), W23 (2,128,128), B (8,128)."""
    out_dim = 1 + 2 * action_size
    assert obs_size <= LANE, "obs_size must fit in one 128-lane slab"
    assert out_dim <= LANE, "1 + 2*action_size must fit in one 128-lane slab"
    obs_pad = _round_up(obs_size, 8)

    w1 = jnp.zeros((obs_pad, LANE), jnp.float32)
    w1 = w1.at[:obs_size, :HIDDEN].set(params["w1v"])
    w1 = w1.at[:obs_size, HIDDEN:].set(params["w1p"])

    w2 = jnp.zeros((LANE, LANE), jnp.float32)
    w2 = w2.at[:HIDDEN, :HIDDEN].set(params["w2v"])
    w2 = w2.at[HIDDEN:, HIDDEN:].set(params["w2p"])

    w3 = jnp.zeros((LANE, LANE), jnp.float32)
    w3 = w3.at[:HIDDEN, 0:1].set(params["w3v"])
    w3 = w3.at[HIDDEN:, 1:out_dim].set(params["w3p"])

    W1 = w1.astype(compute_dtype)
    W23 = jnp.stack([w2, w3]).astype(compute_dtype)      # (2, 128, 128)

    B = jnp.zeros((8, LANE), jnp.float32)                 # rows 0..2 used, f32
    B = B.at[0:1, :HIDDEN].set(params["b1v"])
    B = B.at[0:1, HIDDEN:].set(params["b1p"])
    B = B.at[1:2, :HIDDEN].set(params["b2v"])
    B = B.at[1:2, HIDDEN:].set(params["b2p"])
    B = B.at[2:3, 0:1].set(params["b3v"])
    B = B.at[2:3, 1:out_dim].set(params["b3p"])
    return W1, W23, B


@partial(jax.jit, static_argnames=("action_size", "max_tile_b", "use_bf16"))
def model_forward(x, params, action_size, max_tile_b=2048, use_bf16=True):
    """Fused value+policy forward; returns the PyTorch-style output dict."""
    batch, obs_size = x.shape
    assert obs_size <= LANE and 1 + 2 * action_size <= LANE

    compute_dtype = jnp.bfloat16 if use_bf16 else jnp.float32
    obs_pad = _round_up(obs_size, 8)
    W1, W23, B = _pack_params(params, obs_size, action_size, compute_dtype)

    tb = _choose_tile_b(batch, max_tile_b)
    padded_batch = _round_up(max(batch, 1), tb)

    # Single small pad: obs -> next multiple of 8 lanes, batch -> tile multiple.
    x_pad = jnp.pad(x.astype(compute_dtype),
                    ((0, padded_batch - batch), (0, obs_pad - obs_size)))

    out = pl.pallas_call(
        _fused_mlp_kernel,
        out_shape=jax.ShapeDtypeStruct((padded_batch, LANE), jnp.float32),
        grid=(padded_batch // tb,),
        in_specs=[
            pl.BlockSpec((tb, obs_pad), lambda i: (i, 0)),         # x tile
            pl.BlockSpec((obs_pad, LANE), lambda i: (0, 0)),       # W1
            pl.BlockSpec((2, LANE, LANE), lambda i: (0, 0, 0)),    # W2, W3
            pl.BlockSpec((8, LANE), lambda i: (0, 0)),             # biases
        ],
        out_specs=pl.BlockSpec((tb, LANE), lambda i: (i, 0)),
        compiler_params=pltpu.CompilerParams(
            dimension_semantics=("parallel",)),
    )(x_pad, W1, W23, B)

    out = out[:batch]
    v = out[:, 0:1]
    pi = out[:, 1:1 + 2 * action_size]
    return {
        "value": v,
        "action": pi,
        "action_mean": pi[..., :action_size],
        "action_logstd": pi[..., action_size:],
    }


def init_params(key, obs_size, action_size):
    """Deterministic synthetic parameters (shapes match the torch module)."""
    hidden = HIDDEN
    pi_dim = 2 * action_size
    keys = jax.random.split(key, 12)

    def w(k, fan_in, fan_out):
        bound = 1.0 / jnp.sqrt(fan_in)
        return jax.random.uniform(k, (fan_in, fan_out), jnp.float32,
                                  -bound, bound)

    def b(k, fan_in, fan_out):
        bound = 1.0 / jnp.sqrt(fan_in)
        return jax.random.uniform(k, (1, fan_out), jnp.float32, -bound, bound)

    return {
        # value head
        "w1v": w(keys[0], obs_size, hidden), "b1v": b(keys[1], obs_size, hidden),
        "w2v": w(keys[2], hidden, hidden),   "b2v": b(keys[3], hidden, hidden),
        "w3v": w(keys[4], hidden, 1),        "b3v": b(keys[5], hidden, 1),
        # policy head
        "w1p": w(keys[6], obs_size, hidden), "b1p": b(keys[7], obs_size, hidden),
        "w2p": w(keys[8], hidden, hidden),   "b2p": b(keys[9], hidden, hidden),
        "w3p": w(keys[10], hidden, pi_dim),  "b3p": b(keys[11], hidden, pi_dim),
    }


def reference_forward(x, params, action_size):
    """Pure-JAX f32 reference for correctness checking."""
    h = jnp.tanh(x @ params["w1v"] + params["b1v"])
    h = jnp.tanh(h @ params["w2v"] + params["b2v"])
    v = h @ params["w3v"] + params["b3v"]
    g = jnp.tanh(x @ params["w1p"] + params["b1p"])
    g = jnp.tanh(g @ params["w2p"] + params["b2p"])
    pi = g @ params["w3p"] + params["b3p"]
    return {
        "value": v,
        "action": pi,
        "action_mean": pi[..., :action_size],
        "action_logstd": pi[..., action_size:],
    }


def _check(out, ref, atol, rtol, tag):
    for name in ("value", "action", "action_mean", "action_logstd"):
        assert out[name].shape == ref[name].shape, (tag, name)
        assert jnp.allclose(out[name], ref[name], atol=atol, rtol=rtol), (tag, name)


if __name__ == "__main__":
    # Hopper-like small shapes: obs_size=11, action_size=3, batch=8.
    obs_size, action_size, batch = 11, 3, 8

    key = jax.random.PRNGKey(0)
    k_x, k_p, k_x2 = jax.random.split(key, 3)

    x = jax.random.normal(k_x, (batch, obs_size), jnp.float32)
    params = init_params(k_p, obs_size, action_size)
    ref = reference_forward(x, params, action_size)

    # 1) Exact f32 path: fusion / packing must be bit-faithful.
    out_f32 = model_forward(x, params, action_size, use_bf16=False)
    out_f32 = jax.tree_util.tree_map(jax.block_until_ready, out_f32)
    _check(out_f32, ref, atol=1e-5, rtol=1e-5, tag="f32")

    # 2) Default bf16-operand path (native MXU); looser tolerance.
    out_bf16 = model_forward(x, params, action_size)
    out_bf16 = jax.tree_util.tree_map(jax.block_until_ready, out_bf16)
    _check(out_bf16, ref, atol=5e-2, rtol=5e-2, tag="bf16")

    # 3) Multi-tile grid with a non-multiple batch (exercises padding path).
    batch2 = 333
    x2 = jax.random.normal(k_x2, (batch2, obs_size), jnp.float32)
    out2 = model_forward(x2, params, action_size, max_tile_b=128)
    out2 = jax.tree_util.tree_map(jax.block_until_ready, out2)
    ref2 = reference_forward(x2, params, action_size)
    _check(out2, ref2, atol=5e-2, rtol=5e-2, tag="bf16_multitile")

    print("KERNEL_OK")
</pallas_src>

<mosaic_0001>
module attributes {stable_mosaic.version = 11 : i64} {
  func.func @_fused_mlp_kernel(%arg0: i32, %arg1: memref<8x16xf32, #tpu.memory_space<vmem>>, %arg2: memref<16x128xf32, #tpu.memory_space<vmem>>, %arg3: memref<2x128x128xf32, #tpu.memory_space<vmem>>, %arg4: memref<8x128xf32, #tpu.memory_space<vmem>>, %arg5: memref<8x128xf32, #tpu.memory_space<vmem>>) attributes {dimension_semantics = [#tpu.dimension_semantics<parallel>], iteration_bounds = array<i64: 1>, scalar_prefetch = 0 : i64, scratch_operands = 0 : i64, tpu.core_type = #tpu.core_type<tc>, window_params = [{transform_indices = @transform_0, window_bounds = array<i64: 8, 16>}, {pipeline_mode = #tpu.pipeline_mode<synchronous>, transform_indices = @transform_1, window_bounds = array<i64: 16, 128>}, {pipeline_mode = #tpu.pipeline_mode<synchronous>, transform_indices = @transform_2, window_bounds = array<i64: 2, 128, 128>}, {pipeline_mode = #tpu.pipeline_mode<synchronous>, transform_indices = @transform_3, window_bounds = array<i64: 8, 128>}, {transform_indices = @transform_4, window_bounds = array<i64: 8, 128>}]} {
    %c0 = arith.constant 0 : index
    %c0_0 = arith.constant 0 : index
    %0 = vector.load %arg4[%c0, %c0_0] : memref<8x128xf32, #tpu.memory_space<vmem>>, vector<8x128xf32>
    %c0_1 = arith.constant 0 : index
    %c0_2 = arith.constant 0 : index
    %1 = vector.load %arg1[%c0_1, %c0_2] : memref<8x16xf32, #tpu.memory_space<vmem>>, vector<8x16xf32>
    %c0_3 = arith.constant 0 : index
    %c0_4 = arith.constant 0 : index
    %2 = vector.load %arg2[%c0_3, %c0_4] : memref<16x128xf32, #tpu.memory_space<vmem>>, vector<16x128xf32>
    %cst = arith.constant dense<0.000000e+00> : vector<8x128xf32>
    %3 = tpu.matmul %1, %2, %cst {dimension_numbers = #tpu.dot_dimension_numbers<[1], [0], [0], [1], [0, 0, 1, 1], [], []>} : vector<8x16xf32>, vector<16x128xf32>, vector<8x128xf32> -> vector<8x128xf32>
    %4 = vector.extract_strided_slice %0 {offsets = [0, 0], sizes = [1, 128], strides = [1, 1]} : vector<8x128xf32> to vector<1x128xf32>
    %5 = vector.broadcast %4 : vector<1x128xf32> to vector<8x128xf32>
    %6 = arith.addf %3, %5 : vector<8x128xf32>
    %7 = math.tanh %6 : vector<8x128xf32>
    %c0_5 = arith.constant 0 : index
    %c0_6 = arith.constant 0 : index
    %c0_7 = arith.constant 0 : index
    %8 = vector.load %arg3[%c0_5, %c0_6, %c0_7] : memref<2x128x128xf32, #tpu.memory_space<vmem>>, vector<1x128x128xf32>
    %9 = vector.shape_cast %8 : vector<1x128x128xf32> to vector<128x128xf32>
    %cst_8 = arith.constant dense<0.000000e+00> : vector<8x128xf32>
    %10 = tpu.matmul %7, %9, %cst_8 {dimension_numbers = #tpu.dot_dimension_numbers<[1], [0], [0], [1], [0, 0, 1, 1], [], []>} : vector<8x128xf32>, vector<128x128xf32>, vector<8x128xf32> -> vector<8x128xf32>
    %11 = vector.extract_strided_slice %0 {offsets = [1, 0], sizes = [1, 128], strides = [1, 1]} : vector<8x128xf32> to vector<1x128xf32>
    %12 = vector.broadcast %11 : vector<1x128xf32> to vector<8x128xf32>
    %13 = arith.addf %10, %12 : vector<8x128xf32>
    %14 = math.tanh %13 : vector<8x128xf32>
    %c1 = arith.constant 1 : index
    %c0_9 = arith.constant 0 : index
    %c0_10 = arith.constant 0 : index
    %15 = vector.load %arg3[%c1, %c0_9, %c0_10] : memref<2x128x128xf32, #tpu.memory_space<vmem>>, vector<1x128x128xf32>
    %16 = vector.shape_cast %15 : vector<1x128x128xf32> to vector<128x128xf32>
    %cst_11 = arith.constant dense<0.000000e+00> : vector<8x128xf32>
    %17 = tpu.matmul %14, %16, %cst_11 {dimension_numbers = #tpu.dot_dimension_numbers<[1], [0], [0], [1], [0, 0, 1, 1], [], []>} : vector<8x128xf32>, vector<128x128xf32>, vector<8x128xf32> -> vector<8x128xf32>
    %18 = vector.extract_strided_slice %0 {offsets = [2, 0], sizes = [1, 128], strides = [1, 1]} : vector<8x128xf32> to vector<1x128xf32>
    %19 = vector.broadcast %18 : vector<1x128xf32> to vector<8x128xf32>
    %20 = arith.addf %17, %19 : vector<8x128xf32>
    %c0_12 = arith.constant 0 : index
    %c0_13 = arith.constant 0 : index
    %21 = vector.load %arg5[%c0_12, %c0_13] : memref<8x128xf32, #tpu.memory_space<vmem>>, vector<8x128xf32>
    tpu.vector_store %arg5[%c0_12, %c0_13], %20 {strides = array<i32>} : memref<8x128xf32, #tpu.memory_space<vmem>>, vector<8x128xf32>,
    return
  }
  func.func @transform_0(%arg0: i32) -> (i32, i32) {
    %c0_i32 = arith.constant 0 : i32
    %c0_i32_0 = arith.constant 0 : i32
    return %arg0, %c0_i32 : i32, i32
  }
  func.func @transform_1(%arg0: i32) -> (i32, i32) {
    %c0_i32 = arith.constant 0 : i32
    %c0_i32_0 = arith.constant 0 : i32
    %c0_i32_1 = arith.constant 0 : i32
    return %c0_i32, %c0_i32_0 : i32, i32
  }
  func.func @transform_2(%arg0: i32) -> (i32, i32, i32) {
    %c0_i32 = arith.constant 0 : i32
    %c0_i32_0 = arith.constant 0 : i32
    %c0_i32_1 = arith.constant 0 : i32
    %c0_i32_2 = arith.constant 0 : i32
    return %c0_i32, %c0_i32_0, %c0_i32_1 : i32, i32, i32
  }
  func.func @transform_3(%arg0: i32) -> (i32, i32) {
    %c0_i32 = arith.constant 0 : i32
    %c0_i32_0 = arith.constant 0 : i32
    %c0_i32_1 = arith.constant 0 : i32
    return %c0_i32, %c0_i32_0 : i32, i32
  }
  func.func @transform_4(%arg0: i32) -> (i32, i32) {
    %c0_i32 = arith.constant 0 : i32
    %c0_i32_0 = arith.constant 0 : i32
    return %arg0, %c0_i32 : i32, i32
  }
}

</mosaic_0001>

<llo_original>
// kernel: model_forward.1
$region0: #{model_forward.1}
  #allocation0 [shape = 'u32[]', space=smem, size = 0x4, offset = 0x4, fixed_abs, tag = 'smem constant byte address 0x4 - core index']
  #allocation1 [shape = 'u32[72,128]{1,0:T(1,128)}', space=vmem, size = 0x9000, scoped, tag = 'internal scratch']
  %s0 = inlined_call_operand.vmem [shape: f32[8,16], index: 0, kind: input, shape index: {}]
  %s1 = inlined_call_operand.vmem [shape: f32[16,128], index: 1, kind: input, shape index: {}]
  %s2 = inlined_call_operand.vmem [shape: f32[2,128,128], index: 2, kind: input, shape index: {}]
  %s3 = inlined_call_operand.vmem [shape: f32[8,128], index: 3, kind: input, shape index: {}]
  %s4 = inlined_call_operand.vmem [shape: f32[8,128], index: 4, kind: output, shape index: {}]
  %s5 = sld [smem:[#allocation0]]
  $region26: #{model_forward.1} parent=0
    _
  %s7 = ssub.s32 1, %s5
  %s8 = scalar_select 0, %s7, %s5
  // Predicated region
  $region2: #{model_forward.1} parent=0 // pred_check
    _
  $region3: #{model_forward.1} parent=0 // pred_check_branch
    %10 = sbr.rel (0) target = $region5
  $region4: #{model_forward.1} parent=0 // pred_region
    _
  $region5: #{model_forward.1} parent=0 // pred_fallthru
    _
  // Predicated region
  $region6: #{model_forward.1} parent=0 // pred_check
    _
  $region7: #{model_forward.1} parent=0 // pred_check_branch
    %12 = sbr.rel (0) target = $region9
  $region8: #{model_forward.1} parent=0 // pred_region
    _
  $region9: #{model_forward.1} parent=0 // pred_fallthru
    _
  // Predicated region
  $region10: #{model_forward.1} parent=0 // pred_check
    _
  $region11: #{model_forward.1} parent=0 // pred_check_branch
    %14 = sbr.rel (0) target = $region13
  $region12: #{model_forward.1} parent=0 // pred_region
    _
  $region13: #{model_forward.1} parent=0 // pred_fallthru
    _
  // Predicated region
  $region14: #{model_forward.1} parent=0 // pred_check
    _
  $region15: #{model_forward.1} parent=0 // pred_check_branch
    %16 = sbr.rel (0) target = $region17
  $region16: #{model_forward.1} parent=0 // pred_region
    _
  $region17: #{model_forward.1} parent=0 // pred_fallthru
    _
  %v17 = vld [vmem:[%s3] sm:$0xff]
  %v18 = vld [vmem:[%s0] sm:$0xff]
  %v19 = vld [vmem:[%s1] sm:$0xff]
  %v20 = vld [vmem:[%s1 + $0x8] sm:$0xff]
  %v21 = vperm.slane %v17, 0
  %vm22 = vcmask 130048
  %v24 = vsel %vm22, %v18, 0
  %26 = vmatpush.msra.mxu0 0.0
  %27 = vmatpush.msra.mxu0 0.0
  %28 = vmatpush.msra.mxu0 0.0
  %29 = vmatpush.msra.mxu0 0.0
  %30 = vmatpush.msra.mxu0 0.0
  %31 = vmatpush.msra.mxu0 0.0
  %32 = vmatpush.msra.mxu0 0.0
  %33 = vmatpush.msra.mxu0 0.0
  %34 = vmatpush.msra.mxu0 0.0
  %35 = vmatpush.msra.mxu0 0.0
  %36 = vmatpush.msra.mxu0 0.0
  %37 = vmatpush.msra.mxu0 0.0
  %38 = vmatpush.msra.mxu0 0.0
  %39 = vmatpush.msra.mxu0 0.0
  %40 = vmatpush.msra.mxu0 %v20
  %41 = vmatpush.msra.mxu0 %v19
  %42 = vmatmul.f32.gmra.mxu0 %v24
  %v43 = vpop.f32.mrf.mxu0
  %v44 = vadd.f32 %v21, %v43
  %45 = vdwg.mxu0
  %v46 = vtanh.pop %v44
  %v47 = vld [vmem:[%s2] sm:$0xff]
  %v48 = vld [vmem:[%s2 + $0x8] sm:$0xff]
  %v49 = vld [vmem:[%s2 + $0x10] sm:$0xff]
  %v50 = vld [vmem:[%s2 + $0x18] sm:$0xff]
  %v51 = vld [vmem:[%s2 + $0x20] sm:$0xff]
  %v52 = vld [vmem:[%s2 + $0x28] sm:$0xff]
  %v53 = vld [vmem:[%s2 + $0x30] sm:$0xff]
  %v54 = vld [vmem:[%s2 + $0x38] sm:$0xff]
  %v55 = vld [vmem:[%s2 + $0x40] sm:$0xff]
  %v56 = vld [vmem:[%s2 + $0x48] sm:$0xff]
  %v57 = vld [vmem:[%s2 + $0x50] sm:$0xff]
  %v58 = vld [vmem:[%s2 + $0x58] sm:$0xff]
  %v59 = vld [vmem:[%s2 + $0x60] sm:$0xff]
  %v60 = vld [vmem:[%s2 + $0x68] sm:$0xff]
  %v61 = vld [vmem:[%s2 + $0x70] sm:$0xff]
  %v62 = vld [vmem:[%s2 + $0x78] sm:$0xff]
  %v63 = vperm.slane %v17, 1
  %64 = vmatpush.msra.mxu0 %v62
  %65 = vmatpush.msra.mxu0 %v61
  %66 = vmatpush.msra.mxu0 %v60
  %67 = vmatpush.msra.mxu0 %v59
  %68 = vmatpush.msra.mxu0 %v58
  %69 = vmatpush.msra.mxu0 %v57
  %70 = vmatpush.msra.mxu0 %v56
  %71 = vmatpush.msra.mxu0 %v55
  %72 = vmatpush.msra.mxu0 %v54
  %73 = vmatpush.msra.mxu0 %v53
  %74 = vmatpush.msra.mxu0 %v52
  %75 = vmatpush.msra.mxu0 %v51
  %76 = vmatpush.msra.mxu0 %v50
  %77 = vmatpush.msra.mxu0 %v49
  %78 = vmatpush.msra.mxu0 %v48
  %79 = vmatpush.msra.mxu0 %v47
  %80 = vmatmul.f32.gmra.mxu0 %v46
  %v81 = vpop.f32.mrf.mxu0
  %v82 = vadd.f32 %v63, %v81
  %83 = vdwg.mxu0
  %v84 = vtanh.pop %v82
  %s85 = scalar_lea.vmem %s2, 128
  %v86 = vld [vmem:[%s85] sm:$0xff]
  %v87 = vld [vmem:[%s85 + $0x8] sm:$0xff]
  %v88 = vld [vmem:[%s85 + $0x10] sm:$0xff]
  %v89 = vld [vmem:[%s85 + $0x18] sm:$0xff]
  %v90 = vld [vmem:[%s85 + $0x20] sm:$0xff]
  %v91 = vld [vmem:[%s85 + $0x28] sm:$0xff]
  %v92 = vld [vmem:[%s85 + $0x30] sm:$0xff]
  %v93 = vld [vmem:[%s85 + $0x38] sm:$0xff]
  %v94 = vld [vmem:[%s85 + $0x40] sm:$0xff]
  %v95 = vld [vmem:[%s85 + $0x48] sm:$0xff]
  %v96 = vld [vmem:[%s85 + $0x50] sm:$0xff]
  %v97 = vld [vmem:[%s85 + $0x58] sm:$0xff]
  %v98 = vld [vmem:[%s85 + $0x60] sm:$0xff]
  %v99 = vld [vmem:[%s85 + $0x68] sm:$0xff]
  %v100 = vld [vmem:[%s85 + $0x70] sm:$0xff]
  %v101 = vld [vmem:[%s85 + $0x78] sm:$0xff]
  %v102 = vperm.slane %v17, 2
  %103 = vmatpush.msra.mxu0 %v101
  %104 = vmatpush.msra.mxu0 %v100
  %105 = vmatpush.msra.mxu0 %v99
  %106 = vmatpush.msra.mxu0 %v98
  %107 = vmatpush.msra.mxu0 %v97
  %108 = vmatpush.msra.mxu0 %v96
  %109 = vmatpush.msra.mxu0 %v95
  %110 = vmatpush.msra.mxu0 %v94
  %111 = vmatpush.msra.mxu0 %v93
  %112 = vmatpush.msra.mxu0 %v92
  %113 = vmatpush.msra.mxu0 %v91
  %114 = vmatpush.msra.mxu0 %v90
  %115 = vmatpush.msra.mxu0 %v89
  %116 = vmatpush.msra.mxu0 %v88
  %117 = vmatpush.msra.mxu0 %v87
  %118 = vmatpush.msra.mxu0 %v86
  %119 = vmatmul.f32.gmra.mxu0 %v84
  %v120 = vpop.f32.mrf.mxu0
  %v121 = vadd.f32 %v102, %v120
  %122 = vdwg.mxu0
  %123 = vst [vmem:[%s4] sm:$0xff] %v121
  // Predicated region
  $region18: #{model_forward.1} parent=0 // pred_check
    _
  $region19: #{model_forward.1} parent=0 // pred_check_branch
    %125 = sbr.rel (0) target = $region21
  $region20: #{model_forward.1} parent=0 // pred_region
    _
  $region21: #{model_forward.1} parent=0 // pred_fallthru
    _
  // Predicated region
  $region22: #{model_forward.1} parent=0 // pred_check
    _
  $region23: #{model_forward.1} parent=0 // pred_check_branch
    %127 = sbr.rel (0) target = $region25
  $region24: #{model_forward.1} parent=0 // pred_region
    _
  $region25: #{model_forward.1} parent=0 // pred_fallthru
    _

</llo_original>
